<compile_context>
chip_gen: v5e
topology: v5e:2x2
jax: 0.10.0
libtpu: 0.0.40
codegen_flags: <defaults>
</compile_context>

<pallas_src>
import functools

import jax
import jax.numpy as jnp
from jax.experimental import pallas as pl
from jax.experimental.pallas import tpu as pltpu

HIDDEN = 64     # real hidden width of the PyTorch module
LANE = 128      # TPU lane width; hidden width is padded to this for the MXU


def _round_up(n, m):
    return ((n + m - 1) // m) * m


def _make_qnet_kernel(num_outputs):
    def kernel(x_ref, w1_ref, b1_ref, w2_ref, b2_ref, w3_ref, b3_ref, o_ref):
        # All math in f32; MXU matmuls accumulate in f32.
        x = x_ref[...]
        h = jnp.tanh(
            jnp.dot(x, w1_ref[...], preferred_element_type=jnp.float32)
            + b1_ref[...]
        )
        h = jnp.tanh(
            jnp.dot(h, w2_ref[...], preferred_element_type=jnp.float32)
            + b2_ref[...]
        )
        y = (
            jnp.dot(h, w3_ref[...], preferred_element_type=jnp.float32)
            + b3_ref[...]
        )
        # Store only the real output columns (masked vst); avoids writing a
        # lane-padded 128-wide f32 slab to HBM plus a post-kernel slice pass.
        o_ref[...] = y[:, :num_outputs].astype(o_ref.dtype)

    return kernel


def q_network_forward(x, padded, num_outputs, *, tb_max=4096):
    """x: [B, S] float32. padded: lane-padded f32 params from pad_params()."""
    B, S = x.shape

    # Split B evenly into tiles: >=2 tiles whenever B > 8 (v7x megacore gets
    # work), tiles rounded up to 8 sublanes, padding capped at 7 rows.
    n_tiles = max(2, pl.cdiv(B, tb_max)) if B > 8 else 1
    TB = _round_up(pl.cdiv(B, n_tiles), 8)
    n_tiles = pl.cdiv(B, TB)
    B_pad = n_tiles * TB
    if B_pad != B:
        x = jnp.pad(x, ((0, B_pad - B), (0, 0)))
    grid = (n_tiles,)

    def w_spec(shape):
        # weights/biases: same block every step -> DMA'd once, VMEM-resident
        return pl.BlockSpec(shape, lambda i: (0, 0))

    in_specs = [
        pl.BlockSpec((TB, S), lambda i: (i, 0)),      # x tile streams per step
        w_spec((S, LANE)), w_spec((1, LANE)),         # fc1
        w_spec((LANE, LANE)), w_spec((1, LANE)),      # fc2
        w_spec((LANE, LANE)), w_spec((1, LANE)),      # fc3 (cols lane-padded)
    ]
    # Output block's last dim equals the full array dim (num_outputs), which
    # is legal even though it is < 128; accepts a masked store.
    out_specs = pl.BlockSpec((TB, num_outputs), lambda i: (i, 0))

    flops = 2 * B_pad * (S * LANE + LANE * LANE + LANE * LANE)
    bytes_accessed = (
        B_pad * S * 4
        + sum(int(v.size) * v.dtype.itemsize for v in padded.values())
        + B_pad * num_outputs * 4
    )
    cost = pl.CostEstimate(
        flops=flops,
        transcendentals=2 * B_pad * LANE,
        bytes_accessed=bytes_accessed,
    )

    out = pl.pallas_call(
        _make_qnet_kernel(num_outputs),
        out_shape=jax.ShapeDtypeStruct((B_pad, num_outputs), jnp.float32),
        grid=grid,
        in_specs=in_specs,
        out_specs=out_specs,
        compiler_params=pltpu.CompilerParams(
            dimension_semantics=("parallel",),
        ),
        cost_estimate=cost,
    )(
        x,
        padded["w1"], padded["b1"],
        padded["w2"], padded["b2"],
        padded["w3"], padded["b3"],
    )
    # slice off batch padding (column padding no longer exists)
    return out[:B] if B_pad != B else out


def init_params(key, state_dim, action_dim, hidden=HIDDEN):
    """PyTorch nn.Linear-style init: U(-1/sqrt(fan_in), 1/sqrt(fan_in)). Real shapes, f32."""
    dims = [(state_dim, hidden), (hidden, hidden), (hidden, action_dim)]
    params = {}
    for i, (fan_in, fan_out) in enumerate(dims, start=1):
        key, kw, kb = jax.random.split(key, 3)
        bound = 1.0 / jnp.sqrt(jnp.float32(fan_in))
        params[f"w{i}"] = jax.random.uniform(
            kw, (fan_in, fan_out), jnp.float32, -bound, bound
        )
        params[f"b{i}"] = jax.random.uniform(
            kb, (1, fan_out), jnp.float32, -bound, bound
        )
    return params


def pad_params(params):
    """Zero-pad hidden/output widths to LANE lanes; everything stays f32
    (kernel is HBM-bound on activations/outputs, bf16 weights buy nothing)."""
    def pad2(a, rows, cols):
        out = jnp.zeros((rows, cols), jnp.float32)
        return out.at[: a.shape[0], : a.shape[1]].set(a)

    S = params["w1"].shape[0]
    return {
        "w1": pad2(params["w1"], S, LANE),
        "b1": pad2(params["b1"], 1, LANE),
        "w2": pad2(params["w2"], LANE, LANE),
        "b2": pad2(params["b2"], 1, LANE),
        "w3": pad2(params["w3"], LANE, LANE),
        "b3": pad2(params["b3"], 1, LANE),
    }


def reference_forward(x, params):
    h = jnp.tanh(x @ params["w1"] + params["b1"])
    h = jnp.tanh(h @ params["w2"] + params["b2"])
    return h @ params["w3"] + params["b3"]


if __name__ == "__main__":
    key = jax.random.PRNGKey(0)
    k_x, k_p = jax.random.split(key)

    B = 2   # batch
    S = 8   # input_size[0]
    A = 4   # num_outputs

    x = jax.random.normal(k_x, (B, S), dtype=jnp.float32)
    params = init_params(k_p, S, A)
    padded = pad_params(params)

    out = q_network_forward(x, padded, A)
    out = jax.block_until_ready(out)

    ref = reference_forward(x, params)
    assert out.shape == (B, A)
    # f32 weights + f32 accumulation -> tight tolerance vs f32 reference
    assert jnp.allclose(out, ref, atol=5e-3, rtol=5e-3), "mismatch vs JAX reference"

    print("KERNEL_OK")
</pallas_src>

<mosaic_0001>
module attributes {stable_mosaic.version = 11 : i64} {
  func.func @kernel(%arg0: i32, %arg1: memref<8x8xf32, #tpu.memory_space<vmem>>, %arg2: memref<8x128xf32, #tpu.memory_space<vmem>>, %arg3: memref<1x128xf32, #tpu.memory_space<vmem>>, %arg4: memref<128x128xf32, #tpu.memory_space<vmem>>, %arg5: memref<1x128xf32, #tpu.memory_space<vmem>>, %arg6: memref<128x128xf32, #tpu.memory_space<vmem>>, %arg7: memref<1x128xf32, #tpu.memory_space<vmem>>, %arg8: memref<8x4xf32, #tpu.memory_space<vmem>>) attributes {dimension_semantics = [#tpu.dimension_semantics<parallel>], iteration_bounds = array<i64: 1>, scalar_prefetch = 0 : i64, scratch_operands = 0 : i64, tpu.core_type = #tpu.core_type<tc>, window_params = [{transform_indices = @transform_0, window_bounds = array<i64: 8, 8>}, {pipeline_mode = #tpu.pipeline_mode<synchronous>, transform_indices = @transform_1, window_bounds = array<i64: 8, 128>}, {pipeline_mode = #tpu.pipeline_mode<synchronous>, transform_indices = @transform_2, window_bounds = array<i64: 1, 128>}, {pipeline_mode = #tpu.pipeline_mode<synchronous>, transform_indices = @transform_3, window_bounds = array<i64: 128, 128>}, {pipeline_mode = #tpu.pipeline_mode<synchronous>, transform_indices = @transform_4, window_bounds = array<i64: 1, 128>}, {pipeline_mode = #tpu.pipeline_mode<synchronous>, transform_indices = @transform_5, window_bounds = array<i64: 128, 128>}, {pipeline_mode = #tpu.pipeline_mode<synchronous>, transform_indices = @transform_6, window_bounds = array<i64: 1, 128>}, {transform_indices = @transform_7, window_bounds = array<i64: 8, 4>}]} {
    %c0 = arith.constant 0 : index
    %c0_0 = arith.constant 0 : index
    %0 = vector.load %arg1[%c0, %c0_0] : memref<8x8xf32, #tpu.memory_space<vmem>>, vector<8x8xf32>
    %c0_1 = arith.constant 0 : index
    %c0_2 = arith.constant 0 : index
    %1 = vector.load %arg2[%c0_1, %c0_2] : memref<8x128xf32, #tpu.memory_space<vmem>>, vector<8x128xf32>
    %cst = arith.constant dense<0.000000e+00> : vector<8x128xf32>
    %2 = tpu.matmul %0, %1, %cst {dimension_numbers = #tpu.dot_dimension_numbers<[1], [0], [0], [1], [0, 0, 1, 1], [], []>} : vector<8x8xf32>, vector<8x128xf32>, vector<8x128xf32> -> vector<8x128xf32>
    %c0_3 = arith.constant 0 : index
    %c0_4 = arith.constant 0 : index
    %3 = vector.load %arg3[%c0_3, %c0_4] : memref<1x128xf32, #tpu.memory_space<vmem>>, vector<1x128xf32>
    %4 = vector.broadcast %3 : vector<1x128xf32> to vector<8x128xf32>
    %5 = arith.addf %2, %4 : vector<8x128xf32>
    %6 = math.tanh %5 : vector<8x128xf32>
    %c0_5 = arith.constant 0 : index
    %c0_6 = arith.constant 0 : index
    %7 = vector.load %arg4[%c0_5, %c0_6] : memref<128x128xf32, #tpu.memory_space<vmem>>, vector<128x128xf32>
    %cst_7 = arith.constant dense<0.000000e+00> : vector<8x128xf32>
    %8 = tpu.matmul %6, %7, %cst_7 {dimension_numbers = #tpu.dot_dimension_numbers<[1], [0], [0], [1], [0, 0, 1, 1], [], []>} : vector<8x128xf32>, vector<128x128xf32>, vector<8x128xf32> -> vector<8x128xf32>
    %c0_8 = arith.constant 0 : index
    %c0_9 = arith.constant 0 : index
    %9 = vector.load %arg5[%c0_8, %c0_9] : memref<1x128xf32, #tpu.memory_space<vmem>>, vector<1x128xf32>
    %10 = vector.broadcast %9 : vector<1x128xf32> to vector<8x128xf32>
    %11 = arith.addf %8, %10 : vector<8x128xf32>
    %12 = math.tanh %11 : vector<8x128xf32>
    %c0_10 = arith.constant 0 : index
    %c0_11 = arith.constant 0 : index
    %13 = vector.load %arg6[%c0_10, %c0_11] : memref<128x128xf32, #tpu.memory_space<vmem>>, vector<128x128xf32>
    %cst_12 = arith.constant dense<0.000000e+00> : vector<8x128xf32>
    %14 = tpu.matmul %12, %13, %cst_12 {dimension_numbers = #tpu.dot_dimension_numbers<[1], [0], [0], [1], [0, 0, 1, 1], [], []>} : vector<8x128xf32>, vector<128x128xf32>, vector<8x128xf32> -> vector<8x128xf32>
    %c0_13 = arith.constant 0 : index
    %c0_14 = arith.constant 0 : index
    %15 = vector.load %arg7[%c0_13, %c0_14] : memref<1x128xf32, #tpu.memory_space<vmem>>, vector<1x128xf32>
    %16 = vector.broadcast %15 : vector<1x128xf32> to vector<8x128xf32>
    %17 = arith.addf %14, %16 : vector<8x128xf32>
    %18 = vector.extract_strided_slice %17 {offsets = [0, 0], sizes = [8, 4], strides = [1, 1]} : vector<8x128xf32> to vector<8x4xf32>
    %c0_15 = arith.constant 0 : index
    %c0_16 = arith.constant 0 : index
    %19 = vector.load %arg8[%c0_15, %c0_16] : memref<8x4xf32, #tpu.memory_space<vmem>>, vector<8x4xf32>
    tpu.vector_store %arg8[%c0_15, %c0_16], %18 {strides = array<i32>} : memref<8x4xf32, #tpu.memory_space<vmem>>, vector<8x4xf32>,
    return
  }
  func.func @transform_0(%arg0: i32) -> (i32, i32) {
    %c0_i32 = arith.constant 0 : i32
    %c0_i32_0 = arith.constant 0 : i32
    return %arg0, %c0_i32 : i32, i32
  }
  func.func @transform_1(%arg0: i32) -> (i32, i32) {
    %c0_i32 = arith.constant 0 : i32
    %c0_i32_0 = arith.constant 0 : i32
    %c0_i32_1 = arith.constant 0 : i32
    return %c0_i32, %c0_i32_0 : i32, i32
  }
  func.func @transform_2(%arg0: i32) -> (i32, i32) {
    %c0_i32 = arith.constant 0 : i32
    %c0_i32_0 = arith.constant 0 : i32
    %c0_i32_1 = arith.constant 0 : i32
    return %c0_i32, %c0_i32_0 : i32, i32
  }
  func.func @transform_3(%arg0: i32) -> (i32, i32) {
    %c0_i32 = arith.constant 0 : i32
    %c0_i32_0 = arith.constant 0 : i32
    %c0_i32_1 = arith.constant 0 : i32
    return %c0_i32, %c0_i32_0 : i32, i32
  }
  func.func @transform_4(%arg0: i32) -> (i32, i32) {
    %c0_i32 = arith.constant 0 : i32
    %c0_i32_0 = arith.constant 0 : i32
    %c0_i32_1 = arith.constant 0 : i32
    return %c0_i32, %c0_i32_0 : i32, i32
  }
  func.func @transform_5(%arg0: i32) -> (i32, i32) {
    %c0_i32 = arith.constant 0 : i32
    %c0_i32_0 = arith.constant 0 : i32
    %c0_i32_1 = arith.constant 0 : i32
    return %c0_i32, %c0_i32_0 : i32, i32
  }
  func.func @transform_6(%arg0: i32) -> (i32, i32) {
    %c0_i32 = arith.constant 0 : i32
    %c0_i32_0 = arith.constant 0 : i32
    %c0_i32_1 = arith.constant 0 : i32
    return %c0_i32, %c0_i32_0 : i32, i32
  }
  func.func @transform_7(%arg0: i32) -> (i32, i32) {
    %c0_i32 = arith.constant 0 : i32
    %c0_i32_0 = arith.constant 0 : i32
    return %arg0, %c0_i32 : i32, i32
  }
}

</mosaic_0001>

<llo_original>
// kernel: tpu_custom_call.1
$region0: #{tpu_custom_call.1}
  #allocation0 [shape = 'u32[]', space=smem, size = 0x4, offset = 0x4, fixed_abs, tag = 'smem constant byte address 0x4 - core index']
  #allocation1 [shape = 'u32[72,128]{1,0:T(1,128)}', space=vmem, size = 0x9000, scoped, tag = 'internal scratch']
  %s0 = inlined_call_operand.hbm [shape: f32[8,8], index: 0, kind: input, shape index: {}]
  %s1 = inlined_call_operand.hbm [shape: f32[8,128], index: 1, kind: input, shape index: {}]
  %s2 = inlined_call_operand.vmem [shape: f32[1,128], index: 2, kind: input, shape index: {}]
  %s3 = inlined_call_operand.hbm [shape: f32[128,128], index: 3, kind: input, shape index: {}]
  %s4 = inlined_call_operand.vmem [shape: f32[1,128], index: 4, kind: input, shape index: {}]
  %s5 = inlined_call_operand.hbm [shape: f32[128,128], index: 5, kind: input, shape index: {}]
  %s6 = inlined_call_operand.vmem [shape: f32[1,128], index: 6, kind: input, shape index: {}]
  %s7 = inlined_call_operand.vmem [shape: f32[8,4], index: 7, kind: output, shape index: {}]
  %s8 = sld [smem:[#allocation0]]
  $region54: #{tpu_custom_call.1} parent=0
    _
  %s10 = ssub.s32 1, %s8
  %s11 = scalar_select 0, %s10, %s8
  $region1: #{tpu_custom_call.1} parent=0
    #allocation2 [shape = 'u8[4096]{0}', space=vmem, size = 0x1000, scoped, tag = 'input window, operand 0, single buffered']
    #allocation3 [shape = 's32[1]{0}', space=sflag, size = 0x4, scoped, tag = 'scoped memory for tpu_custom_call.1']
    #allocation4 [shape = 'u8[4096]{0}', space=vmem, size = 0x1000, scoped, tag = 'input window, operand 1, single buffered']
    #allocation5 [shape = 's32[1]{0}', space=sflag, size = 0x4, scoped, tag = 'scoped memory for tpu_custom_call.1']
    #allocation6 [shape = 'u8[65536]{0}', space=vmem, size = 0x10000, scoped, tag = 'input window, operand 3, single buffered']
    #allocation7 [shape = 'u8[65536]{0}', space=vmem, size = 0x10000, scoped, tag = 'input window, operand 5, single buffered']
    #allocation8 [shape = 's32[1]{0}', space=sflag, size = 0x4, scoped, tag = 'scoped memory for tpu_custom_call.1']
    %12 = vsyncpa [#allocation3], 0
    %13 = vsyncpa [#allocation5], 0
    %14 = vsyncpa [#allocation8], 0
    // Predicated region
    $region2: #{tpu_custom_call.1} parent=1 // pred_check
      _
    $region3: #{tpu_custom_call.1} parent=1 // pred_check_branch
      %16 = sbr.rel (0) target = $region5
    $region4: #{tpu_custom_call.1} parent=1 // pred_region
      %18 = vsyncadd [#allocation3], 0
      %s20 = sshll.u32 %s0, 4
      %s21 = int_to_ptr.hbm [resolvable:$true] %s20
      %s22 = sshll.u32 [#allocation2], 4
      %s23 = int_to_ptr.vmem [resolvable:$true] %s22
      %25 = dma.hbm_to_vmem [thread:$0]  %s21, 128, %s23, [#allocation3]
    $region5: #{tpu_custom_call.1} parent=1 // pred_fallthru
      _
    // Predicated region
    $region6: #{tpu_custom_call.1} parent=1 // pred_check
      _
    $region7: #{tpu_custom_call.1} parent=1 // pred_check_branch
      %27 = sbr.rel (0) target = $region9
    $region8: #{tpu_custom_call.1} parent=1 // pred_region
      %29 = vsyncadd [#allocation5], 0
      %s31 = sshll.u32 %s1, 4
      %s32 = int_to_ptr.hbm [resolvable:$true] %s31
      %s33 = sshll.u32 [#allocation4], 4
      %s34 = int_to_ptr.vmem [resolvable:$true] %s33
      %36 = dma.hbm_to_vmem [thread:$0]  %s32, 128, %s34, [#allocation5]
    $region9: #{tpu_custom_call.1} parent=1 // pred_fallthru
      _
    // Predicated region
    $region10: #{tpu_custom_call.1} parent=1 // pred_check
      _
    $region11: #{tpu_custom_call.1} parent=1 // pred_check_branch
      %38 = sbr.rel (0) target = $region13
    $region12: #{tpu_custom_call.1} parent=1 // pred_region
      _
    $region13: #{tpu_custom_call.1} parent=1 // pred_fallthru
      _
    // Predicated region
    $region14: #{tpu_custom_call.1} parent=1 // pred_check
      _
    $region15: #{tpu_custom_call.1} parent=1 // pred_check_branch
      %40 = sbr.rel (0) target = $region17
    $region16: #{tpu_custom_call.1} parent=1 // pred_region
      %42 = vsyncadd [#allocation5], 0
      %s43 = sshll.u32 %s3, 4
      %s44 = int_to_ptr.hbm [resolvable:$true] %s43
      %s45 = sshll.u32 [#allocation6], 4
      %s46 = int_to_ptr.vmem [resolvable:$true] %s45
      %51 = dma.hbm_to_vmem [thread:$0]  %s44, 2048, %s46, [#allocation5], 128, 128, 8
    $region17: #{tpu_custom_call.1} parent=1 // pred_fallthru
      _
    // Predicated region
    $region18: #{tpu_custom_call.1} parent=1 // pred_check
      _
    $region19: #{tpu_custom_call.1} parent=1 // pred_check_branch
      %53 = sbr.rel (0) target = $region21
    $region20: #{tpu_custom_call.1} parent=1 // pred_region
      _
    $region21: #{tpu_custom_call.1} parent=1 // pred_fallthru
      _
    // Predicated region
    $region22: #{tpu_custom_call.1} parent=1 // pred_check
      _
    $region23: #{tpu_custom_call.1} parent=1 // pred_check_branch
      %55 = sbr.rel (0) target = $region25
    $region24: #{tpu_custom_call.1} parent=1 // pred_region
      %57 = vsyncadd [#allocation8], 0
      %s58 = sshll.u32 %s5, 4
      %s59 = int_to_ptr.hbm [resolvable:$true] %s58
      %s60 = sshll.u32 [#allocation7], 4
      %s61 = int_to_ptr.vmem [resolvable:$true] %s60
      %66 = dma.hbm_to_vmem [thread:$0]  %s59, 2048, %s61, [#allocation8], 128, 128, 8
    $region25: #{tpu_custom_call.1} parent=1 // pred_fallthru
      _
    // Predicated region
    $region26: #{tpu_custom_call.1} parent=1 // pred_check
      _
    $region27: #{tpu_custom_call.1} parent=1 // pred_check_branch
      %68 = sbr.rel (0) target = $region29
    $region28: #{tpu_custom_call.1} parent=1 // pred_region
      _
    $region29: #{tpu_custom_call.1} parent=1 // pred_fallthru
      _
    // Predicated region
    $region30: #{tpu_custom_call.1} parent=1 // pred_check
      _
    $region31: #{tpu_custom_call.1} parent=1 // pred_check_branch
      %70 = sbr.rel (0) target = $region33
    $region32: #{tpu_custom_call.1} parent=1 // pred_region
      %72 = dma.done [#allocation3], 128
    $region33: #{tpu_custom_call.1} parent=1 // pred_fallthru
      _
    // Predicated region
    $region34: #{tpu_custom_call.1} parent=1 // pred_check
      _
    $region35: #{tpu_custom_call.1} parent=1 // pred_check_branch
      %74 = sbr.rel (0) target = $region37
    $region36: #{tpu_custom_call.1} parent=1 // pred_region
      %76 = dma.done [#allocation5], 128
    $region37: #{tpu_custom_call.1} parent=1 // pred_fallthru
      _
    // Predicated region
    $region38: #{tpu_custom_call.1} parent=1 // pred_check
      _
    $region39: #{tpu_custom_call.1} parent=1 // pred_check_branch
      %78 = sbr.rel (0) target = $region41
    $region40: #{tpu_custom_call.1} parent=1 // pred_region
      %80 = dma.done [#allocation5], 2048
    $region41: #{tpu_custom_call.1} parent=1 // pred_fallthru
      _
    // Predicated region
    $region42: #{tpu_custom_call.1} parent=1 // pred_check
      _
    $region43: #{tpu_custom_call.1} parent=1 // pred_check_branch
      %82 = sbr.rel (0) target = $region45
    $region44: #{tpu_custom_call.1} parent=1 // pred_region
      %84 = dma.done [#allocation8], 2048
    $region45: #{tpu_custom_call.1} parent=1 // pred_fallthru
      _
    %v85 = vld [vmem:[#allocation2] sm:$0xff]
    %v86 = vld [vmem:[#allocation4] sm:$0xff]
    %v87 = vld [vmem:[%s2] sm:$0x1]
    %v89 = vperm.slane %v87, 0
    %vm91 = vcmask 64512
    %v93 = vsel %vm91, %v85, 0
    %95 = vmatpush.msra.mxu0 0.0
    %96 = vmatpush.msra.mxu0 0.0
    %97 = vmatpush.msra.mxu0 0.0
    %98 = vmatpush.msra.mxu0 0.0
    %99 = vmatpush.msra.mxu0 0.0
    %100 = vmatpush.msra.mxu0 0.0
    %101 = vmatpush.msra.mxu0 0.0
    %102 = vmatpush.msra.mxu0 0.0
    %103 = vmatpush.msra.mxu0 0.0
    %104 = vmatpush.msra.mxu0 0.0
    %105 = vmatpush.msra.mxu0 0.0
    %106 = vmatpush.msra.mxu0 0.0
    %107 = vmatpush.msra.mxu0 0.0
    %108 = vmatpush.msra.mxu0 0.0
    %109 = vmatpush.msra.mxu0 0.0
    %110 = vmatpush.msra.mxu0 %v86
    %111 = vmatmul.f32.gmra.mxu0 %v93
    %v112 = vpop.f32.mrf.mxu0
    %v113 = vadd.f32 %v89, %v112
    %114 = vdwg.mxu0
    %v115 = vtanh.pop %v113
    %v116 = vld [vmem:[#allocation6] sm:$0xff]
    %v117 = vld [vmem:[#allocation6 + $0x8] sm:$0xff]
    %v118 = vld [vmem:[#allocation6 + $0x10] sm:$0xff]
    %v119 = vld [vmem:[#allocation6 + $0x18] sm:$0xff]
    %v120 = vld [vmem:[#allocation6 + $0x20] sm:$0xff]
    %v121 = vld [vmem:[#allocation6 + $0x28] sm:$0xff]
    %v122 = vld [vmem:[#allocation6 + $0x30] sm:$0xff]
    %v123 = vld [vmem:[#allocation6 + $0x38] sm:$0xff]
    %v124 = vld [vmem:[#allocation6 + $0x40] sm:$0xff]
    %v125 = vld [vmem:[#allocation6 + $0x48] sm:$0xff]
    %v126 = vld [vmem:[#allocation6 + $0x50] sm:$0xff]
    %v127 = vld [vmem:[#allocation6 + $0x58] sm:$0xff]
    %v128 = vld [vmem:[#allocation6 + $0x60] sm:$0xff]
    %v129 = vld [vmem:[#allocation6 + $0x68] sm:$0xff]
    %v130 = vld [vmem:[#allocation6 + $0x70] sm:$0xff]
    %v131 = vld [vmem:[#allocation6 + $0x78] sm:$0xff]
    %v132 = vld [vmem:[%s4] sm:$0x1]
    %v134 = vperm.slane %v132, 0
    %136 = vmatpush.msra.mxu0 %v131
    %137 = vmatpush.msra.mxu0 %v130
    %138 = vmatpush.msra.mxu0 %v129
    %139 = vmatpush.msra.mxu0 %v128
    %140 = vmatpush.msra.mxu0 %v127
    %141 = vmatpush.msra.mxu0 %v126
    %142 = vmatpush.msra.mxu0 %v125
    %143 = vmatpush.msra.mxu0 %v124
    %144 = vmatpush.msra.mxu0 %v123
    %145 = vmatpush.msra.mxu0 %v122
    %146 = vmatpush.msra.mxu0 %v121
    %147 = vmatpush.msra.mxu0 %v120
    %148 = vmatpush.msra.mxu0 %v119
    %149 = vmatpush.msra.mxu0 %v118
    %150 = vmatpush.msra.mxu0 %v117
    %151 = vmatpush.msra.mxu0 %v116
    %152 = vmatmul.f32.gmra.mxu0 %v115
    %v153 = vpop.f32.mrf.mxu0
    %v154 = vadd.f32 %v134, %v153
    %155 = vdwg.mxu0
    %v156 = vtanh.pop %v154
    %v157 = vld [vmem:[#allocation7] sm:$0xff]
    %v158 = vld [vmem:[#allocation7 + $0x8] sm:$0xff]
    %v159 = vld [vmem:[#allocation7 + $0x10] sm:$0xff]
    %v160 = vld [vmem:[#allocation7 + $0x18] sm:$0xff]
    %v161 = vld [vmem:[#allocation7 + $0x20] sm:$0xff]
    %v162 = vld [vmem:[#allocation7 + $0x28] sm:$0xff]
    %v163 = vld [vmem:[#allocation7 + $0x30] sm:$0xff]
    %v164 = vld [vmem:[#allocation7 + $0x38] sm:$0xff]
    %v165 = vld [vmem:[#allocation7 + $0x40] sm:$0xff]
    %v166 = vld [vmem:[#allocation7 + $0x48] sm:$0xff]
    %v167 = vld [vmem:[#allocation7 + $0x50] sm:$0xff]
    %v168 = vld [vmem:[#allocation7 + $0x58] sm:$0xff]
    %v169 = vld [vmem:[#allocation7 + $0x60] sm:$0xff]
    %v170 = vld [vmem:[#allocation7 + $0x68] sm:$0xff]
    %v171 = vld [vmem:[#allocation7 + $0x70] sm:$0xff]
    %v172 = vld [vmem:[#allocation7 + $0x78] sm:$0xff]
    %v173 = vld [vmem:[%s6] sm:$0x1]
    %v175 = vperm.slane %v173, 0
    %177 = vmatpush.msra.mxu0 %v172
    %178 = vmatpush.msra.mxu0 %v171
    %179 = vmatpush.msra.mxu0 %v170
    %180 = vmatpush.msra.mxu0 %v169
    %181 = vmatpush.msra.mxu0 %v168
    %182 = vmatpush.msra.mxu0 %v167
    %183 = vmatpush.msra.mxu0 %v166
    %184 = vmatpush.msra.mxu0 %v165
    %185 = vmatpush.msra.mxu0 %v164
    %186 = vmatpush.msra.mxu0 %v163
    %187 = vmatpush.msra.mxu0 %v162
    %188 = vmatpush.msra.mxu0 %v161
    %189 = vmatpush.msra.mxu0 %v160
    %190 = vmatpush.msra.mxu0 %v159
    %191 = vmatpush.msra.mxu0 %v158
    %192 = vmatpush.msra.mxu0 %v157
    %193 = vmatmul.f32.gmra.mxu0 %v156
    %v194 = vpop.f32.mrf.mxu0
    %v195 = vadd.f32 %v175, %v194
    %196 = vdwg.mxu0
    %vm197 = vcmask 31744
    %198 = vst.msk [vmem:[%s7] sm:$0xff] %vm197, %v195
    // Predicated region
    $region46: #{tpu_custom_call.1} parent=1 // pred_check
      _
    $region47: #{tpu_custom_call.1} parent=1 // pred_check_branch
      %200 = sbr.rel (0) target = $region49
    $region48: #{tpu_custom_call.1} parent=1 // pred_region
      _
    $region49: #{tpu_custom_call.1} parent=1 // pred_fallthru
      _
    // Predicated region
    $region50: #{tpu_custom_call.1} parent=1 // pred_check
      _
    $region51: #{tpu_custom_call.1} parent=1 // pred_check_branch
      %202 = sbr.rel (0) target = $region53
    $region52: #{tpu_custom_call.1} parent=1 // pred_region
      _
    $region53: #{tpu_custom_call.1} parent=1 // pred_fallthru
      _
    %203 = vsyncpa [#allocation3], 1
    %204 = vsyncpa [#allocation5], 1
    %205 = vsyncpa [#allocation8], 1

</llo_original>
